<compile_context>
chip_gen: v5e
topology: v5e:2x2
jax: 0.10.0
libtpu: 0.0.40
codegen_flags: <defaults>
</compile_context>

<pallas_src>
from functools import partial

import jax
import jax.numpy as jnp
from jax.experimental import pallas as pl
from jax.experimental.pallas import tpu as pltpu

HIDDEN = 128          # nn.Linear hidden width in DQN
OBS_PAD = 8           # padded observation width (sublane-friendly, == full last dim)
N_LAYERS = 4
TM = 128              # batch tile (rows per grid step); 256+ for big batches


def dqn_kernel(x_ref, w1_ref, w_ref, b_ref, o_ref):
    """4-layer MLP: three Linear+ReLU, final Linear.

    x_ref:  (TM, 8)        f32   observations (zero-padded 4 -> 8)
    w1_ref: (8, 128)       f32   layer-1 weight (tiny K, kept f32)
    w_ref:  (3, 128, 128)  bf16  layers 2..4 weights (MXU-native)
    b_ref:  (4, 8, 128)    f32   biases, row 0 valid (sublane broadcast add)
    o_ref:  (TM, 128)      f32   Q-values in cols [:n_actions], zeros elsewhere
    """
    # Layer 1: K=8 matmul in f32 (negligible FLOPs vs layers 2-4).
    z = jnp.dot(x_ref[...], w1_ref[...], preferred_element_type=jnp.float32)
    h = jnp.maximum(z + b_ref[0, 0:1, :], 0.0).astype(jnp.bfloat16)

    # Layers 2, 3: bf16 MXU, f32 accumulate, f32 bias/ReLU.
    for i in range(2):
        z = jnp.dot(h, w_ref[i], preferred_element_type=jnp.float32)
        h = jnp.maximum(z + b_ref[i + 1, 0:1, :], 0.0).astype(jnp.bfloat16)

    # Layer 4 (no ReLU).
    z = jnp.dot(h, w_ref[2], preferred_element_type=jnp.float32)
    o_ref[...] = (z + b_ref[3, 0:1, :]).astype(o_ref.dtype)


def prepare_params(params):
    """One-time pad / stack / cast of the nn.Linear parameters.

    Returns (w1, w_stack, b_stack), reusable for any batch size / tile size.
    """
    n_obs = params["w1"].shape[0]

    w1 = jnp.zeros((OBS_PAD, HIDDEN), jnp.float32)
    w1 = w1.at[:n_obs, :].set(params["w1"].astype(jnp.float32))

    w_stack = jnp.zeros((N_LAYERS - 1, HIDDEN, HIDDEN), jnp.bfloat16)
    for i in range(1, N_LAYERS):                       # layers 2..4
        w = params[f"w{i + 1}"]
        wi, wo = w.shape
        w_stack = w_stack.at[i - 1, :wi, :wo].set(w.astype(jnp.bfloat16))

    b_stack = jnp.zeros((N_LAYERS, 8, HIDDEN), jnp.float32)
    for i in range(N_LAYERS):
        b = params[f"b{i + 1}"]
        b_stack = b_stack.at[i, 0, :b.shape[0]].set(b.astype(jnp.float32))

    return w1, w_stack, b_stack


@partial(jax.jit, static_argnames=("n_actions", "tm"))
def dqn_forward_pallas(x, w1, w_stack, b_stack, *, n_actions, tm=TM):
    """x: (B, n_observations) f32 -> (B, n_actions) f32 via one pallas_call."""
    B, n_obs = x.shape
    b_pad = tm * ((B + tm - 1) // tm)

    # Single fused pad (batch -> b_pad rows, features -> OBS_PAD lanes).
    x_p = jnp.pad(x, ((0, b_pad - B), (0, OBS_PAD - n_obs)))

    out_p = pl.pallas_call(
        dqn_kernel,
        out_shape=jax.ShapeDtypeStruct((b_pad, HIDDEN), jnp.float32),
        grid=(b_pad // tm,),
        in_specs=[
            pl.BlockSpec((tm, OBS_PAD), lambda i: (i, 0)),                     # x tile
            pl.BlockSpec((OBS_PAD, HIDDEN), lambda i: (0, 0)),                 # w1 (resident)
            pl.BlockSpec((N_LAYERS - 1, HIDDEN, HIDDEN), lambda i: (0, 0, 0)),  # w2..4 (resident)
            pl.BlockSpec((N_LAYERS, 8, HIDDEN), lambda i: (0, 0, 0)),           # biases (resident)
        ],
        out_specs=pl.BlockSpec((tm, HIDDEN), lambda i: (i, 0)),  # 128-lane dense stores
        compiler_params=pltpu.CompilerParams(
            dimension_semantics=("parallel",)),   # megacore-shardable on v7x
    )(x_p, w1, w_stack, b_stack)

    return out_p[:B, :n_actions]


def dqn_reference(x, params):
    h = jax.nn.relu(x @ params["w1"] + params["b1"])
    h = jax.nn.relu(h @ params["w2"] + params["b2"])
    h = jax.nn.relu(h @ params["w3"] + params["b3"])
    return h @ params["w4"] + params["b4"]


def dqn_forward(x, params, w1, w_stack, b_stack, *, n_actions, tm=TM):
    """Route tiny acting-loop batches to fused XLA; batched work to Pallas."""
    if x.shape[0] < 32:
        return dqn_reference(x, params)
    return dqn_forward_pallas(x, w1, w_stack, b_stack, n_actions=n_actions, tm=tm)


def init_dqn_params(key, n_observations, n_actions):
    """Deterministic PyTorch-style (uniform +-1/sqrt(fan_in)) init."""
    dims = [(n_observations, HIDDEN), (HIDDEN, HIDDEN),
            (HIDDEN, HIDDEN), (HIDDEN, n_actions)]
    params = {}
    for i, (fan_in, fan_out) in enumerate(dims, start=1):
        key, kw, kb = jax.random.split(key, 3)
        bound = 1.0 / jnp.sqrt(jnp.float32(fan_in))
        params[f"w{i}"] = jax.random.uniform(
            kw, (fan_in, fan_out), jnp.float32, -bound, bound)
        params[f"b{i}"] = jax.random.uniform(
            kb, (fan_out,), jnp.float32, -bound, bound)
    return params


if __name__ == "__main__":
    n_observations = 4   # CartPole-v1 state dim
    n_actions = 2        # CartPole-v1 action space

    key = jax.random.PRNGKey(0)
    key, kx_small, kx_big = jax.random.split(key, 3)
    params = init_dqn_params(key, n_observations, n_actions)

    # Pad / stack / cast parameters exactly once (TM-independent).
    w1, w_stack, b_stack = prepare_params(params)

    # 1) Small acting-loop batch, forced through the Pallas path to validate it.
    x_small = jax.random.normal(kx_small, (2, n_observations), jnp.float32)
    out_small = jax.block_until_ready(
        dqn_forward_pallas(x_small, w1, w_stack, b_stack, n_actions=n_actions))
    ref_small = dqn_reference(x_small, params)
    assert out_small.shape == (2, n_actions)
    assert jnp.allclose(out_small, ref_small, atol=3e-2, rtol=3e-2)

    # 2) Batched (replay/training-style) case: 2 parallel batch tiles (v7x megacore).
    x_big = jax.random.normal(kx_big, (256, n_observations), jnp.float32)
    out_big = jax.block_until_ready(
        dqn_forward_pallas(x_big, w1, w_stack, b_stack, n_actions=n_actions))
    ref_big = dqn_reference(x_big, params)
    assert out_big.shape == (256, n_actions)
    assert jnp.allclose(out_big, ref_big, atol=3e-2, rtol=3e-2)

    print("KERNEL_OK")
</pallas_src>

<mosaic_0001>
module attributes {stable_mosaic.version = 11 : i64} {
  func.func @dqn_kernel(%arg0: i32, %arg1: memref<128x8xf32, #tpu.memory_space<vmem>>, %arg2: memref<8x128xf32, #tpu.memory_space<vmem>>, %arg3: memref<3x128x128xbf16, #tpu.memory_space<vmem>>, %arg4: memref<4x8x128xf32, #tpu.memory_space<vmem>>, %arg5: memref<128x128xf32, #tpu.memory_space<vmem>>) attributes {dimension_semantics = [#tpu.dimension_semantics<parallel>], iteration_bounds = array<i64: 1>, scalar_prefetch = 0 : i64, scratch_operands = 0 : i64, tpu.core_type = #tpu.core_type<tc>, window_params = [{transform_indices = @transform_0, window_bounds = array<i64: 128, 8>}, {pipeline_mode = #tpu.pipeline_mode<synchronous>, transform_indices = @transform_1, window_bounds = array<i64: 8, 128>}, {pipeline_mode = #tpu.pipeline_mode<synchronous>, transform_indices = @transform_2, window_bounds = array<i64: 3, 128, 128>}, {pipeline_mode = #tpu.pipeline_mode<synchronous>, transform_indices = @transform_3, window_bounds = array<i64: 4, 8, 128>}, {transform_indices = @transform_4, window_bounds = array<i64: 128, 128>}]} {
    %c0 = arith.constant 0 : index
    %c0_0 = arith.constant 0 : index
    %0 = vector.load %arg1[%c0, %c0_0] : memref<128x8xf32, #tpu.memory_space<vmem>>, vector<128x8xf32>
    %c0_1 = arith.constant 0 : index
    %c0_2 = arith.constant 0 : index
    %1 = vector.load %arg2[%c0_1, %c0_2] : memref<8x128xf32, #tpu.memory_space<vmem>>, vector<8x128xf32>
    %cst = arith.constant dense<0.000000e+00> : vector<128x128xf32>
    %2 = tpu.matmul %0, %1, %cst {dimension_numbers = #tpu.dot_dimension_numbers<[1], [0], [0], [1], [0, 0, 1, 1], [], []>} : vector<128x8xf32>, vector<8x128xf32>, vector<128x128xf32> -> vector<128x128xf32>
    %c0_3 = arith.constant 0 : index
    %c0_4 = arith.constant 0 : index
    %c0_5 = arith.constant 0 : index
    %3 = vector.load %arg4[%c0_3, %c0_4, %c0_5] : memref<4x8x128xf32, #tpu.memory_space<vmem>>, vector<1x1x128xf32>
    %4 = vector.shape_cast %3 : vector<1x1x128xf32> to vector<1x128xf32>
    %5 = vector.broadcast %4 : vector<1x128xf32> to vector<128x128xf32>
    %6 = arith.addf %2, %5 : vector<128x128xf32>
    %cst_6 = arith.constant 0.000000e+00 : f32
    %7 = vector.broadcast %cst_6 : f32 to vector<128x128xf32>
    %8 = arith.maximumf %6, %7 : vector<128x128xf32>
    %9 = arith.truncf %8 : vector<128x128xf32> to vector<128x128xbf16>
    %c0_7 = arith.constant 0 : index
    %c0_8 = arith.constant 0 : index
    %c0_9 = arith.constant 0 : index
    %10 = vector.load %arg3[%c0_7, %c0_8, %c0_9] : memref<3x128x128xbf16, #tpu.memory_space<vmem>>, vector<1x128x128xbf16>
    %11 = vector.shape_cast %10 : vector<1x128x128xbf16> to vector<128x128xbf16>
    %cst_10 = arith.constant dense<0.000000e+00> : vector<128x128xf32>
    %12 = tpu.matmul %9, %11, %cst_10 {dimension_numbers = #tpu.dot_dimension_numbers<[1], [0], [0], [1], [0, 0, 1, 1], [], []>} : vector<128x128xbf16>, vector<128x128xbf16>, vector<128x128xf32> -> vector<128x128xf32>
    %c1 = arith.constant 1 : index
    %c0_11 = arith.constant 0 : index
    %c0_12 = arith.constant 0 : index
    %13 = vector.load %arg4[%c1, %c0_11, %c0_12] : memref<4x8x128xf32, #tpu.memory_space<vmem>>, vector<1x1x128xf32>
    %14 = vector.shape_cast %13 : vector<1x1x128xf32> to vector<1x128xf32>
    %15 = vector.broadcast %14 : vector<1x128xf32> to vector<128x128xf32>
    %16 = arith.addf %12, %15 : vector<128x128xf32>
    %cst_13 = arith.constant 0.000000e+00 : f32
    %17 = vector.broadcast %cst_13 : f32 to vector<128x128xf32>
    %18 = arith.maximumf %16, %17 : vector<128x128xf32>
    %19 = arith.truncf %18 : vector<128x128xf32> to vector<128x128xbf16>
    %c1_14 = arith.constant 1 : index
    %c0_15 = arith.constant 0 : index
    %c0_16 = arith.constant 0 : index
    %20 = vector.load %arg3[%c1_14, %c0_15, %c0_16] : memref<3x128x128xbf16, #tpu.memory_space<vmem>>, vector<1x128x128xbf16>
    %21 = vector.shape_cast %20 : vector<1x128x128xbf16> to vector<128x128xbf16>
    %cst_17 = arith.constant dense<0.000000e+00> : vector<128x128xf32>
    %22 = tpu.matmul %19, %21, %cst_17 {dimension_numbers = #tpu.dot_dimension_numbers<[1], [0], [0], [1], [0, 0, 1, 1], [], []>} : vector<128x128xbf16>, vector<128x128xbf16>, vector<128x128xf32> -> vector<128x128xf32>
    %c2 = arith.constant 2 : index
    %c0_18 = arith.constant 0 : index
    %c0_19 = arith.constant 0 : index
    %23 = vector.load %arg4[%c2, %c0_18, %c0_19] : memref<4x8x128xf32, #tpu.memory_space<vmem>>, vector<1x1x128xf32>
    %24 = vector.shape_cast %23 : vector<1x1x128xf32> to vector<1x128xf32>
    %25 = vector.broadcast %24 : vector<1x128xf32> to vector<128x128xf32>
    %26 = arith.addf %22, %25 : vector<128x128xf32>
    %cst_20 = arith.constant 0.000000e+00 : f32
    %27 = vector.broadcast %cst_20 : f32 to vector<128x128xf32>
    %28 = arith.maximumf %26, %27 : vector<128x128xf32>
    %29 = arith.truncf %28 : vector<128x128xf32> to vector<128x128xbf16>
    %c2_21 = arith.constant 2 : index
    %c0_22 = arith.constant 0 : index
    %c0_23 = arith.constant 0 : index
    %30 = vector.load %arg3[%c2_21, %c0_22, %c0_23] : memref<3x128x128xbf16, #tpu.memory_space<vmem>>, vector<1x128x128xbf16>
    %31 = vector.shape_cast %30 : vector<1x128x128xbf16> to vector<128x128xbf16>
    %cst_24 = arith.constant dense<0.000000e+00> : vector<128x128xf32>
    %32 = tpu.matmul %29, %31, %cst_24 {dimension_numbers = #tpu.dot_dimension_numbers<[1], [0], [0], [1], [0, 0, 1, 1], [], []>} : vector<128x128xbf16>, vector<128x128xbf16>, vector<128x128xf32> -> vector<128x128xf32>
    %c3 = arith.constant 3 : index
    %c0_25 = arith.constant 0 : index
    %c0_26 = arith.constant 0 : index
    %33 = vector.load %arg4[%c3, %c0_25, %c0_26] : memref<4x8x128xf32, #tpu.memory_space<vmem>>, vector<1x1x128xf32>
    %34 = vector.shape_cast %33 : vector<1x1x128xf32> to vector<1x128xf32>
    %35 = vector.broadcast %34 : vector<1x128xf32> to vector<128x128xf32>
    %36 = arith.addf %32, %35 : vector<128x128xf32>
    %c0_27 = arith.constant 0 : index
    %c0_28 = arith.constant 0 : index
    %37 = vector.load %arg5[%c0_27, %c0_28] : memref<128x128xf32, #tpu.memory_space<vmem>>, vector<128x128xf32>
    tpu.vector_store %arg5[%c0_27, %c0_28], %36 {strides = array<i32>} : memref<128x128xf32, #tpu.memory_space<vmem>>, vector<128x128xf32>,
    return
  }
  func.func @transform_0(%arg0: i32) -> (i32, i32) {
    %c0_i32 = arith.constant 0 : i32
    %c0_i32_0 = arith.constant 0 : i32
    return %arg0, %c0_i32 : i32, i32
  }
  func.func @transform_1(%arg0: i32) -> (i32, i32) {
    %c0_i32 = arith.constant 0 : i32
    %c0_i32_0 = arith.constant 0 : i32
    %c0_i32_1 = arith.constant 0 : i32
    return %c0_i32, %c0_i32_0 : i32, i32
  }
  func.func @transform_2(%arg0: i32) -> (i32, i32, i32) {
    %c0_i32 = arith.constant 0 : i32
    %c0_i32_0 = arith.constant 0 : i32
    %c0_i32_1 = arith.constant 0 : i32
    %c0_i32_2 = arith.constant 0 : i32
    return %c0_i32, %c0_i32_0, %c0_i32_1 : i32, i32, i32
  }
  func.func @transform_3(%arg0: i32) -> (i32, i32, i32) {
    %c0_i32 = arith.constant 0 : i32
    %c0_i32_0 = arith.constant 0 : i32
    %c0_i32_1 = arith.constant 0 : i32
    %c0_i32_2 = arith.constant 0 : i32
    return %c0_i32, %c0_i32_0, %c0_i32_1 : i32, i32, i32
  }
  func.func @transform_4(%arg0: i32) -> (i32, i32) {
    %c0_i32 = arith.constant 0 : i32
    %c0_i32_0 = arith.constant 0 : i32
    return %arg0, %c0_i32 : i32, i32
  }
}

</mosaic_0001>

<llo_original>
// kernel: dqn_forward_pallas.1
$region0: #{dqn_forward_pallas.1}
  #allocation0 [shape = 'u32[]', space=smem, size = 0x4, offset = 0x4, fixed_abs, tag = 'smem constant byte address 0x4 - core index']
  #allocation1 [shape = 'u32[72,128]{1,0:T(1,128)}', space=vmem, size = 0x9000, scoped, tag = 'internal scratch']
  %s0 = inlined_call_operand.vmem [shape: f32[128,8], index: 0, kind: input, shape index: {}]
  %s1 = inlined_call_operand.vmem [shape: f32[8,128], index: 1, kind: input, shape index: {}]
  %s2 = inlined_call_operand.hbm [shape: bf16[3,128,128], index: 2, kind: input, shape index: {}]
  %s3 = inlined_call_operand.vmem [shape: f32[4,8,128], index: 3, kind: input, shape index: {}]
  %s4 = inlined_call_operand.vmem [shape: f32[128,128], index: 4, kind: output, shape index: {}]
  %s5 = sld [smem:[#allocation0]]
  $region30: #{dqn_forward_pallas.1} parent=0
    _
  %s7 = ssub.s32 1, %s5
  %s8 = scalar_select 0, %s7, %s5
  $region1: #{dqn_forward_pallas.1} parent=0
    #allocation2 [shape = 'u8[98304]{0}', space=vmem, size = 0x18000, scoped, tag = 'input window, operand 2, single buffered']
    #allocation3 [shape = 's32[1]{0}', space=sflag, size = 0x4, scoped, tag = 'scoped memory for dqn_forward_pallas.1']
    %9 = vsyncpa [#allocation3], 0
    // Predicated region
    $region2: #{dqn_forward_pallas.1} parent=1 // pred_check
      _
    $region3: #{dqn_forward_pallas.1} parent=1 // pred_check_branch
      %11 = sbr.rel (0) target = $region5
    $region4: #{dqn_forward_pallas.1} parent=1 // pred_region
      _
    $region5: #{dqn_forward_pallas.1} parent=1 // pred_fallthru
      _
    // Predicated region
    $region6: #{dqn_forward_pallas.1} parent=1 // pred_check
      _
    $region7: #{dqn_forward_pallas.1} parent=1 // pred_check_branch
      %13 = sbr.rel (0) target = $region9
    $region8: #{dqn_forward_pallas.1} parent=1 // pred_region
      _
    $region9: #{dqn_forward_pallas.1} parent=1 // pred_fallthru
      _
    // Predicated region
    $region10: #{dqn_forward_pallas.1} parent=1 // pred_check
      _
    $region11: #{dqn_forward_pallas.1} parent=1 // pred_check_branch
      %15 = sbr.rel (0) target = $region13
    $region12: #{dqn_forward_pallas.1} parent=1 // pred_region
      %17 = vsyncadd [#allocation3], 0
      %s18 = sshll.u32 %s2, 4
      %s19 = int_to_ptr.hbm [resolvable:$true] %s18
      %s20 = sshll.u32 [#allocation2], 4
      %s21 = int_to_ptr.vmem [resolvable:$true] %s20
      %26 = dma.hbm_to_vmem [thread:$0]  %s19, 3072, %s21, [#allocation3], 64, 64, 4
    $region13: #{dqn_forward_pallas.1} parent=1 // pred_fallthru
      _
    // Predicated region
    $region14: #{dqn_forward_pallas.1} parent=1 // pred_check
      _
    $region15: #{dqn_forward_pallas.1} parent=1 // pred_check_branch
      %28 = sbr.rel (0) target = $region17
    $region16: #{dqn_forward_pallas.1} parent=1 // pred_region
      _
    $region17: #{dqn_forward_pallas.1} parent=1 // pred_fallthru
      _
    // Predicated region
    $region18: #{dqn_forward_pallas.1} parent=1 // pred_check
      _
    $region19: #{dqn_forward_pallas.1} parent=1 // pred_check_branch
      %30 = sbr.rel (0) target = $region21
    $region20: #{dqn_forward_pallas.1} parent=1 // pred_region
      %32 = dma.done [#allocation3], 3072
    $region21: #{dqn_forward_pallas.1} parent=1 // pred_fallthru
      _
    %v33 = vld [vmem:[%s0] sm:$0xff]
    %v34 = vld [vmem:[%s0 + $0x8] sm:$0xff]
    %v35 = vld [vmem:[%s0 + $0x10] sm:$0xff]
    %v36 = vld [vmem:[%s0 + $0x18] sm:$0xff]
    %v37 = vld [vmem:[%s0 + $0x20] sm:$0xff]
    %v38 = vld [vmem:[%s0 + $0x28] sm:$0xff]
    %v39 = vld [vmem:[%s0 + $0x30] sm:$0xff]
    %v40 = vld [vmem:[%s0 + $0x38] sm:$0xff]
    %v41 = vld [vmem:[%s0 + $0x40] sm:$0xff]
    %v42 = vld [vmem:[%s0 + $0x48] sm:$0xff]
    %v43 = vld [vmem:[%s0 + $0x50] sm:$0xff]
    %v44 = vld [vmem:[%s0 + $0x58] sm:$0xff]
    %v45 = vld [vmem:[%s0 + $0x60] sm:$0xff]
    %v46 = vld [vmem:[%s0 + $0x68] sm:$0xff]
    %v47 = vld [vmem:[%s0 + $0x70] sm:$0xff]
    %v48 = vld [vmem:[%s0 + $0x78] sm:$0xff]
    %v49 = vld [vmem:[%s1] sm:$0xff]
    %v50 = vld [vmem:[%s3] sm:$0x1]
    %v51 = vperm.slane %v50, 0
    %vm52 = vcmask 64512
    %v54 = vsel %vm52, %v33, 0
    %v57 = vsel %vm52, %v34, 0
    %v60 = vsel %vm52, %v35, 0
    %v63 = vsel %vm52, %v36, 0
    %v66 = vsel %vm52, %v37, 0
    %v69 = vsel %vm52, %v38, 0
    %v72 = vsel %vm52, %v39, 0
    %v75 = vsel %vm52, %v40, 0
    %v78 = vsel %vm52, %v41, 0
    %v81 = vsel %vm52, %v42, 0
    %v84 = vsel %vm52, %v43, 0
    %v87 = vsel %vm52, %v44, 0
    %v90 = vsel %vm52, %v45, 0
    %v93 = vsel %vm52, %v46, 0
    %v96 = vsel %vm52, %v47, 0
    %v99 = vsel %vm52, %v48, 0
    %101 = vmatpush.msra.mxu0 0.0
    %102 = vmatpush.msra.mxu0 0.0
    %103 = vmatpush.msra.mxu0 0.0
    %104 = vmatpush.msra.mxu0 0.0
    %105 = vmatpush.msra.mxu0 0.0
    %106 = vmatpush.msra.mxu0 0.0
    %107 = vmatpush.msra.mxu0 0.0
    %108 = vmatpush.msra.mxu0 0.0
    %109 = vmatpush.msra.mxu0 0.0
    %110 = vmatpush.msra.mxu0 0.0
    %111 = vmatpush.msra.mxu0 0.0
    %112 = vmatpush.msra.mxu0 0.0
    %113 = vmatpush.msra.mxu0 0.0
    %114 = vmatpush.msra.mxu0 0.0
    %115 = vmatpush.msra.mxu0 0.0
    %116 = vmatpush.msra.mxu0 %v49
    %117 = vmatmul.f32.gmra.mxu0 %v54
    %v118 = vpop.f32.mrf.mxu0
    %v119 = vadd.f32 %v51, %v118
    %120 = vmatmul.f32.gmra.mxu0 %v57
    %v121 = vpop.f32.mrf.mxu0
    %v122 = vadd.f32 %v51, %v121
    %123 = vmatmul.f32.gmra.mxu0 %v60
    %v124 = vpop.f32.mrf.mxu0
    %v125 = vadd.f32 %v51, %v124
    %126 = vmatmul.f32.gmra.mxu0 %v63
    %v127 = vpop.f32.mrf.mxu0
    %v128 = vadd.f32 %v51, %v127
    %129 = vmatmul.f32.gmra.mxu0 %v66
    %v130 = vpop.f32.mrf.mxu0
    %v131 = vadd.f32 %v51, %v130
    %132 = vmatmul.f32.gmra.mxu0 %v69
    %v133 = vpop.f32.mrf.mxu0
    %v134 = vadd.f32 %v51, %v133
    %135 = vmatmul.f32.gmra.mxu0 %v72
    %v136 = vpop.f32.mrf.mxu0
    %v137 = vadd.f32 %v51, %v136
    %138 = vmatmul.f32.gmra.mxu0 %v75
    %v139 = vpop.f32.mrf.mxu0
    %v140 = vadd.f32 %v51, %v139
    %141 = vmatmul.f32.gmra.mxu0 %v78
    %v142 = vpop.f32.mrf.mxu0
    %v143 = vadd.f32 %v51, %v142
    %144 = vmatmul.f32.gmra.mxu0 %v81
    %v145 = vpop.f32.mrf.mxu0
    %v146 = vadd.f32 %v51, %v145
    %147 = vmatmul.f32.gmra.mxu0 %v84
    %v148 = vpop.f32.mrf.mxu0
    %v149 = vadd.f32 %v51, %v148
    %150 = vmatmul.f32.gmra.mxu0 %v87
    %v151 = vpop.f32.mrf.mxu0
    %v152 = vadd.f32 %v51, %v151
    %153 = vmatmul.f32.gmra.mxu0 %v90
    %v154 = vpop.f32.mrf.mxu0
    %v155 = vadd.f32 %v51, %v154
    %156 = vmatmul.f32.gmra.mxu0 %v93
    %v157 = vpop.f32.mrf.mxu0
    %v158 = vadd.f32 %v51, %v157
    %159 = vmatmul.f32.gmra.mxu0 %v96
    %v160 = vpop.f32.mrf.mxu0
    %v161 = vadd.f32 %v51, %v160
    %162 = vmatmul.f32.gmra.mxu0 %v99
    %v163 = vpop.f32.mrf.mxu0
    %v164 = vadd.f32 %v51, %v163
    %165 = vdwg.mxu0
    %v166 = vmax.f32 %v119, 0.0
    %v167 = vmax.f32 %v122, 0.0
    %v168 = vmax.f32 %v125, 0.0
    %v169 = vmax.f32 %v128, 0.0
    %v170 = vmax.f32 %v131, 0.0
    %v171 = vmax.f32 %v134, 0.0
    %v172 = vmax.f32 %v137, 0.0
    %v173 = vmax.f32 %v140, 0.0
    %v174 = vmax.f32 %v143, 0.0
    %v175 = vmax.f32 %v146, 0.0
    %v176 = vmax.f32 %v149, 0.0
    %v177 = vmax.f32 %v152, 0.0
    %v178 = vmax.f32 %v155, 0.0
    %v179 = vmax.f32 %v158, 0.0
    %v180 = vmax.f32 %v161, 0.0
    %v181 = vmax.f32 %v164, 0.0
    %v182 = vpack.c.bf16 %v167, %v166
    %v183 = vpack.c.bf16 %v169, %v168
    %v184 = vpack.c.bf16 %v171, %v170
    %v185 = vpack.c.bf16 %v173, %v172
    %v186 = vpack.c.bf16 %v175, %v174
    %v187 = vpack.c.bf16 %v177, %v176
    %v188 = vpack.c.bf16 %v179, %v178
    %v189 = vpack.c.bf16 %v181, %v180
    %v190 = vld [vmem:[#allocation2] sm:$0xf]
    %v191 = vld [vmem:[#allocation2 + $0x4] sm:$0xf]
    %v192 = vld [vmem:[#allocation2 + $0x8] sm:$0xf]
    %v193 = vld [vmem:[#allocation2 + $0xc] sm:$0xf]
    %v194 = vld [vmem:[#allocation2 + $0x10] sm:$0xf]
    %v195 = vld [vmem:[#allocation2 + $0x14] sm:$0xf]
    %v196 = vld [vmem:[#allocation2 + $0x18] sm:$0xf]
    %v197 = vld [vmem:[#allocation2 + $0x1c] sm:$0xf]
    %v198 = vld [vmem:[#allocation2 + $0x20] sm:$0xf]
    %v199 = vld [vmem:[#allocation2 + $0x24] sm:$0xf]
    %v200 = vld [vmem:[#allocation2 + $0x28] sm:$0xf]
    %v201 = vld [vmem:[#allocation2 + $0x2c] sm:$0xf]
    %v202 = vld [vmem:[#allocation2 + $0x30] sm:$0xf]
    %v203 = vld [vmem:[#allocation2 + $0x34] sm:$0xf]
    %v204 = vld [vmem:[#allocation2 + $0x38] sm:$0xf]
    %v205 = vld [vmem:[#allocation2 + $0x3c] sm:$0xf]
    %s206 = scalar_lea.vmem %s3, 8
    %v207 = vld [vmem:[%s206] sm:$0x1]
    %v208 = vperm.slane %v207, 0
    %v225 = vunpack.c.l.b16 %v190
    %v226 = vunpack.c.l.b16 %v191
    %v227 = vunpack.c.l.b16 %v192
    %v228 = vunpack.c.l.b16 %v193
    %v229 = vunpack.c.l.b16 %v194
    %v230 = vunpack.c.l.b16 %v195
    %v231 = vunpack.c.l.b16 %v196
    %v232 = vunpack.c.l.b16 %v197
    %v233 = vunpack.c.l.b16 %v198
    %v234 = vunpack.c.l.b16 %v199
    %v235 = vunpack.c.l.b16 %v200
    %v236 = vunpack.c.l.b16 %v201
    %v237 = vunpack.c.l.b16 %v202
    %v238 = vunpack.c.l.b16 %v203
    %v239 = vunpack.c.l.b16 %v204
    %v240 = vunpack.c.l.b16 %v205
    %v241 = vpack.c.b16 %v226, %v225
    %v242 = vpack.c.b16 %v228, %v227
    %v243 = vpack.c.b16 %v230, %v229
    %v244 = vpack.c.b16 %v232, %v231
    %v245 = vpack.c.b16 %v234, %v233
    %v246 = vpack.c.b16 %v236, %v235
    %v247 = vpack.c.b16 %v238, %v237
    %v248 = vpack.c.b16 %v240, %v239
    %257 = vmatpush.bf16.msra.mxu0 %v248
    %258 = vmatpush.bf16.msra.mxu0 %v247
    %259 = vmatpush.bf16.msra.mxu0 %v246
    %260 = vmatpush.bf16.msra.mxu0 %v245
    %261 = vmatpush.bf16.msra.mxu0 %v244
    %262 = vmatpush.bf16.msra.mxu0 %v243
    %263 = vmatpush.bf16.msra.mxu0 %v242
    %264 = vmatpush.bf16.msra.mxu0 %v241
    %265 = vmatmul.bf16.gmra.mxu0 %v182
    %v266 = vpop.f32.mrf.mxu0
    %v267 = vadd.f32 %v208, %v266
    %v268 = vpop.f32.mrf.mxu0
    %v269 = vadd.f32 %v208, %v268
    %270 = vmatmul.bf16.gmra.mxu0 %v183
    %v271 = vpop.f32.mrf.mxu0
    %v272 = vadd.f32 %v208, %v271
    %v273 = vpop.f32.mrf.mxu0
    %v274 = vadd.f32 %v208, %v273
    %275 = vmatmul.bf16.gmra.mxu0 %v184
    %v276 = vpop.f32.mrf.mxu0
    %v277 = vadd.f32 %v208, %v276
    %v278 = vpop.f32.mrf.mxu0
    %v279 = vadd.f32 %v208, %v278
    %280 = vmatmul.bf16.gmra.mxu0 %v185
    %v281 = vpop.f32.mrf.mxu0
    %v282 = vadd.f32 %v208, %v281
    %v283 = vpop.f32.mrf.mxu0
    %v284 = vadd.f32 %v208, %v283
    %285 = vmatmul.bf16.gmra.mxu0 %v186
    %v286 = vpop.f32.mrf.mxu0
    %v287 = vadd.f32 %v208, %v286
    %v288 = vpop.f32.mrf.mxu0
    %v289 = vadd.f32 %v208, %v288
    %290 = vmatmul.bf16.gmra.mxu0 %v187
    %v291 = vpop.f32.mrf.mxu0
    %v292 = vadd.f32 %v208, %v291
    %v293 = vpop.f32.mrf.mxu0
    %v294 = vadd.f32 %v208, %v293
    %295 = vmatmul.bf16.gmra.mxu0 %v188
    %v296 = vpop.f32.mrf.mxu0
    %v297 = vadd.f32 %v208, %v296
    %v298 = vpop.f32.mrf.mxu0
    %v299 = vadd.f32 %v208, %v298
    %300 = vmatmul.bf16.gmra.mxu0 %v189
    %v301 = vpop.f32.mrf.mxu0
    %v302 = vadd.f32 %v208, %v301
    %v303 = vpop.f32.mrf.mxu0
    %v304 = vadd.f32 %v208, %v303
    %305 = vdwg.mxu0
    %v306 = vmax.f32 %v267, 0.0
    %v307 = vmax.f32 %v269, 0.0
    %v308 = vmax.f32 %v272, 0.0
    %v309 = vmax.f32 %v274, 0.0
    %v310 = vmax.f32 %v277, 0.0
    %v311 = vmax.f32 %v279, 0.0
    %v312 = vmax.f32 %v282, 0.0
    %v313 = vmax.f32 %v284, 0.0
    %v314 = vmax.f32 %v287, 0.0
    %v315 = vmax.f32 %v289, 0.0
    %v316 = vmax.f32 %v292, 0.0
    %v317 = vmax.f32 %v294, 0.0
    %v318 = vmax.f32 %v297, 0.0
    %v319 = vmax.f32 %v299, 0.0
    %v320 = vmax.f32 %v302, 0.0
    %v321 = vmax.f32 %v304, 0.0
    %v322 = vpack.c.bf16 %v307, %v306
    %v323 = vpack.c.bf16 %v309, %v308
    %v324 = vpack.c.bf16 %v311, %v310
    %v325 = vpack.c.bf16 %v313, %v312
    %v326 = vpack.c.bf16 %v315, %v314
    %v327 = vpack.c.bf16 %v317, %v316
    %v328 = vpack.c.bf16 %v319, %v318
    %v329 = vpack.c.bf16 %v321, %v320
    %s330 = scalar_lea.vmem [#allocation2], 64
    %v331 = vld [vmem:[%s330] sm:$0xf]
    %v332 = vld [vmem:[%s330 + $0x4] sm:$0xf]
    %v333 = vld [vmem:[%s330 + $0x8] sm:$0xf]
    %v334 = vld [vmem:[%s330 + $0xc] sm:$0xf]
    %v335 = vld [vmem:[%s330 + $0x10] sm:$0xf]
    %v336 = vld [vmem:[%s330 + $0x14] sm:$0xf]
    %v337 = vld [vmem:[%s330 + $0x18] sm:$0xf]
    %v338 = vld [vmem:[%s330 + $0x1c] sm:$0xf]
    %v339 = vld [vmem:[%s330 + $0x20] sm:$0xf]
    %v340 = vld [vmem:[%s330 + $0x24] sm:$0xf]
    %v341 = vld [vmem:[%s330 + $0x28] sm:$0xf]
    %v342 = vld [vmem:[%s330 + $0x2c] sm:$0xf]
    %v343 = vld [vmem:[%s330 + $0x30] sm:$0xf]
    %v344 = vld [vmem:[%s330 + $0x34] sm:$0xf]
    %v345 = vld [vmem:[%s330 + $0x38] sm:$0xf]
    %v346 = vld [vmem:[%s330 + $0x3c] sm:$0xf]
    %s347 = scalar_lea.vmem %s3, 16
    %v348 = vld [vmem:[%s347] sm:$0x1]
    %v349 = vperm.slane %v348, 0
    %v366 = vunpack.c.l.b16 %v331
    %v367 = vunpack.c.l.b16 %v332
    %v368 = vunpack.c.l.b16 %v333
    %v369 = vunpack.c.l.b16 %v334
    %v370 = vunpack.c.l.b16 %v335
    %v371 = vunpack.c.l.b16 %v336
    %v372 = vunpack.c.l.b16 %v337
    %v373 = vunpack.c.l.b16 %v338
    %v374 = vunpack.c.l.b16 %v339
    %v375 = vunpack.c.l.b16 %v340
    %v376 = vunpack.c.l.b16 %v341
    %v377 = vunpack.c.l.b16 %v342
    %v378 = vunpack.c.l.b16 %v343
    %v379 = vunpack.c.l.b16 %v344
    %v380 = vunpack.c.l.b16 %v345
    %v381 = vunpack.c.l.b16 %v346
    %v382 = vpack.c.b16 %v367, %v366
    %v383 = vpack.c.b16 %v369, %v368
    %v384 = vpack.c.b16 %v371, %v370
    %v385 = vpack.c.b16 %v373, %v372
    %v386 = vpack.c.b16 %v375, %v374
    %v387 = vpack.c.b16 %v377, %v376
    %v388 = vpack.c.b16 %v379, %v378
    %v389 = vpack.c.b16 %v381, %v380
    %398 = vmatpush.bf16.msra.mxu0 %v389
    %399 = vmatpush.bf16.msra.mxu0 %v388
    %400 = vmatpush.bf16.msra.mxu0 %v387
    %401 = vmatpush.bf16.msra.mxu0 %v386
    %402 = vmatpush.bf16.msra.mxu0 %v385
    %403 = vmatpush.bf16.msra.mxu0 %v384
    %404 = vmatpush.bf16.msra.mxu0 %v383
    %405 = vmatpush.bf16.msra.mxu0 %v382
    %406 = vmatmul.bf16.gmra.mxu0 %v322
    %v407 = vpop.f32.mrf.mxu0
    %v408 = vadd.f32 %v349, %v407
    %v409 = vpop.f32.mrf.mxu0
    %v410 = vadd.f32 %v349, %v409
    %411 = vmatmul.bf16.gmra.mxu0 %v323
    %v412 = vpop.f32.mrf.mxu0
    %v413 = vadd.f32 %v349, %v412
    %v414 = vpop.f32.mrf.mxu0
    %v415 = vadd.f32 %v349, %v414
    %416 = vmatmul.bf16.gmra.mxu0 %v324
    %v417 = vpop.f32.mrf.mxu0
    %v418 = vadd.f32 %v349, %v417
    %v419 = vpop.f32.mrf.mxu0
    %v420 = vadd.f32 %v349, %v419
    %421 = vmatmul.bf16.gmra.mxu0 %v325
    %v422 = vpop.f32.mrf.mxu0
    %v423 = vadd.f32 %v349, %v422
    %v424 = vpop.f32.mrf.mxu0
    %v425 = vadd.f32 %v349, %v424
    %426 = vmatmul.bf16.gmra.mxu0 %v326
    %v427 = vpop.f32.mrf.mxu0
    %v428 = vadd.f32 %v349, %v427
    %v429 = vpop.f32.mrf.mxu0
    %v430 = vadd.f32 %v349, %v429
    %431 = vmatmul.bf16.gmra.mxu0 %v327
    %v432 = vpop.f32.mrf.mxu0
    %v433 = vadd.f32 %v349, %v432
    %v434 = vpop.f32.mrf.mxu0
    %v435 = vadd.f32 %v349, %v434
    %436 = vmatmul.bf16.gmra.mxu0 %v328
    %v437 = vpop.f32.mrf.mxu0
    %v438 = vadd.f32 %v349, %v437
    %v439 = vpop.f32.mrf.mxu0
    %v440 = vadd.f32 %v349, %v439
    %441 = vmatmul.bf16.gmra.mxu0 %v329
    %v442 = vpop.f32.mrf.mxu0
    %v443 = vadd.f32 %v349, %v442
    %v444 = vpop.f32.mrf.mxu0
    %v445 = vadd.f32 %v349, %v444
    %446 = vdwg.mxu0
    %v447 = vmax.f32 %v408, 0.0
    %v448 = vmax.f32 %v410, 0.0
    %v449 = vmax.f32 %v413, 0.0
    %v450 = vmax.f32 %v415, 0.0
    %v451 = vmax.f32 %v418, 0.0
    %v452 = vmax.f32 %v420, 0.0
    %v453 = vmax.f32 %v423, 0.0
    %v454 = vmax.f32 %v425, 0.0
    %v455 = vmax.f32 %v428, 0.0
    %v456 = vmax.f32 %v430, 0.0
    %v457 = vmax.f32 %v433, 0.0
    %v458 = vmax.f32 %v435, 0.0
    %v459 = vmax.f32 %v438, 0.0
    %v460 = vmax.f32 %v440, 0.0
    %v461 = vmax.f32 %v443, 0.0
    %v462 = vmax.f32 %v445, 0.0
    %v463 = vpack.c.bf16 %v448, %v447
    %v464 = vpack.c.bf16 %v450, %v449
    %v465 = vpack.c.bf16 %v452, %v451
    %v466 = vpack.c.bf16 %v454, %v453
    %v467 = vpack.c.bf16 %v456, %v455
    %v468 = vpack.c.bf16 %v458, %v457
    %v469 = vpack.c.bf16 %v460, %v459
    %v470 = vpack.c.bf16 %v462, %v461
    %s471 = scalar_lea.vmem [#allocation2], 128
    %v472 = vld [vmem:[%s471] sm:$0xf]
    %v473 = vld [vmem:[%s471 + $0x4] sm:$0xf]
    %v474 = vld [vmem:[%s471 + $0x8] sm:$0xf]
    %v475 = vld [vmem:[%s471 + $0xc] sm:$0xf]
    %v476 = vld [vmem:[%s471 + $0x10] sm:$0xf]
    %v477 = vld [vmem:[%s471 + $0x14] sm:$0xf]
    %v478 = vld [vmem:[%s471 + $0x18] sm:$0xf]
    %v479 = vld [vmem:[%s471 + $0x1c] sm:$0xf]
    %v480 = vld [vmem:[%s471 + $0x20] sm:$0xf]
    %v481 = vld [vmem:[%s471 + $0x24] sm:$0xf]
    %v482 = vld [vmem:[%s471 + $0x28] sm:$0xf]
    %v483 = vld [vmem:[%s471 + $0x2c] sm:$0xf]
    %v484 = vld [vmem:[%s471 + $0x30] sm:$0xf]
    %v485 = vld [vmem:[%s471 + $0x34] sm:$0xf]
    %v486 = vld [vmem:[%s471 + $0x38] sm:$0xf]
    %v487 = vld [vmem:[%s471 + $0x3c] sm:$0xf]
    %s488 = scalar_lea.vmem %s3, 24
    %v489 = vld [vmem:[%s488] sm:$0x1]
    %v490 = vperm.slane %v489, 0
    %v507 = vunpack.c.l.b16 %v472
    %v508 = vunpack.c.l.b16 %v473
    %v509 = vunpack.c.l.b16 %v474
    %v510 = vunpack.c.l.b16 %v475
    %v511 = vunpack.c.l.b16 %v476
    %v512 = vunpack.c.l.b16 %v477
    %v513 = vunpack.c.l.b16 %v478
    %v514 = vunpack.c.l.b16 %v479
    %v515 = vunpack.c.l.b16 %v480
    %v516 = vunpack.c.l.b16 %v481
    %v517 = vunpack.c.l.b16 %v482
    %v518 = vunpack.c.l.b16 %v483
    %v519 = vunpack.c.l.b16 %v484
    %v520 = vunpack.c.l.b16 %v485
    %v521 = vunpack.c.l.b16 %v486
    %v522 = vunpack.c.l.b16 %v487
    %v523 = vpack.c.b16 %v508, %v507
    %v524 = vpack.c.b16 %v510, %v509
    %v525 = vpack.c.b16 %v512, %v511
    %v526 = vpack.c.b16 %v514, %v513
    %v527 = vpack.c.b16 %v516, %v515
    %v528 = vpack.c.b16 %v518, %v517
    %v529 = vpack.c.b16 %v520, %v519
    %v530 = vpack.c.b16 %v522, %v521
    %539 = vmatpush.bf16.msra.mxu0 %v530
    %540 = vmatpush.bf16.msra.mxu0 %v529
    %541 = vmatpush.bf16.msra.mxu0 %v528
    %542 = vmatpush.bf16.msra.mxu0 %v527
    %543 = vmatpush.bf16.msra.mxu0 %v526
    %544 = vmatpush.bf16.msra.mxu0 %v525
    %545 = vmatpush.bf16.msra.mxu0 %v524
    %546 = vmatpush.bf16.msra.mxu0 %v523
    %547 = vmatmul.bf16.gmra.mxu0 %v463
    %v548 = vpop.f32.mrf.mxu0
    %v549 = vadd.f32 %v490, %v548
    %v550 = vpop.f32.mrf.mxu0
    %v551 = vadd.f32 %v490, %v550
    %552 = vmatmul.bf16.gmra.mxu0 %v464
    %v553 = vpop.f32.mrf.mxu0
    %v554 = vadd.f32 %v490, %v553
    %v555 = vpop.f32.mrf.mxu0
    %v556 = vadd.f32 %v490, %v555
    %557 = vmatmul.bf16.gmra.mxu0 %v465
    %v558 = vpop.f32.mrf.mxu0
    %v559 = vadd.f32 %v490, %v558
    %v560 = vpop.f32.mrf.mxu0
    %v561 = vadd.f32 %v490, %v560
    %562 = vmatmul.bf16.gmra.mxu0 %v466
    %v563 = vpop.f32.mrf.mxu0
    %v564 = vadd.f32 %v490, %v563
    %v565 = vpop.f32.mrf.mxu0
    %v566 = vadd.f32 %v490, %v565
    %567 = vmatmul.bf16.gmra.mxu0 %v467
    %v568 = vpop.f32.mrf.mxu0
    %v569 = vadd.f32 %v490, %v568
    %v570 = vpop.f32.mrf.mxu0
    %v571 = vadd.f32 %v490, %v570
    %572 = vmatmul.bf16.gmra.mxu0 %v468
    %v573 = vpop.f32.mrf.mxu0
    %v574 = vadd.f32 %v490, %v573
    %v575 = vpop.f32.mrf.mxu0
    %v576 = vadd.f32 %v490, %v575
    %577 = vmatmul.bf16.gmra.mxu0 %v469
    %v578 = vpop.f32.mrf.mxu0
    %v579 = vadd.f32 %v490, %v578
    %v580 = vpop.f32.mrf.mxu0
    %v581 = vadd.f32 %v490, %v580
    %582 = vmatmul.bf16.gmra.mxu0 %v470
    %v583 = vpop.f32.mrf.mxu0
    %v584 = vadd.f32 %v490, %v583
    %v585 = vpop.f32.mrf.mxu0
    %v586 = vadd.f32 %v490, %v585
    %587 = vdwg.mxu0
    %588 = vst [vmem:[%s4] sm:$0xff] %v549
    %589 = vst [vmem:[%s4 + $0x8] sm:$0xff] %v551
    %590 = vst [vmem:[%s4 + $0x10] sm:$0xff] %v554
    %591 = vst [vmem:[%s4 + $0x18] sm:$0xff] %v556
    %592 = vst [vmem:[%s4 + $0x20] sm:$0xff] %v559
    %593 = vst [vmem:[%s4 + $0x28] sm:$0xff] %v561
    %594 = vst [vmem:[%s4 + $0x30] sm:$0xff] %v564
    %595 = vst [vmem:[%s4 + $0x38] sm:$0xff] %v566
    %596 = vst [vmem:[%s4 + $0x40] sm:$0xff] %v569
    %597 = vst [vmem:[%s4 + $0x48] sm:$0xff] %v571
    %598 = vst [vmem:[%s4 + $0x50] sm:$0xff] %v574
    %599 = vst [vmem:[%s4 + $0x58] sm:$0xff] %v576
    %600 = vst [vmem:[%s4 + $0x60] sm:$0xff] %v579
    %601 = vst [vmem:[%s4 + $0x68] sm:$0xff] %v581
    %602 = vst [vmem:[%s4 + $0x70] sm:$0xff] %v584
    %603 = vst [vmem:[%s4 + $0x78] sm:$0xff] %v586
    // Predicated region
    $region22: #{dqn_forward_pallas.1} parent=1 // pred_check
      _
    $region23: #{dqn_forward_pallas.1} parent=1 // pred_check_branch
      %605 = sbr.rel (0) target = $region25
    $region24: #{dqn_forward_pallas.1} parent=1 // pred_region
      _
    $region25: #{dqn_forward_pallas.1} parent=1 // pred_fallthru
      _
    // Predicated region
    $region26: #{dqn_forward_pallas.1} parent=1 // pred_check
      _
    $region27: #{dqn_forward_pallas.1} parent=1 // pred_check_branch
      %607 = sbr.rel (0) target = $region29
    $region28: #{dqn_forward_pallas.1} parent=1 // pred_region
      _
    $region29: #{dqn_forward_pallas.1} parent=1 // pred_fallthru
      _
    %608 = vsyncpa [#allocation3], 1

</llo_original>
